<compile_context>
chip_gen: v5e
topology: v5e:2x2
jax: 0.10.0
libtpu: 0.0.40
codegen_flags: <defaults>
</compile_context>

<pallas_src>
import jax
import jax.numpy as jnp
from jax.experimental import pallas as pl
from jax.experimental.pallas import tpu as pltpu

_LANE = 128
_SINGLE_BLOCK_MAX_BYTES = 256 * 1024   # below this, pipelining buys nothing
_MIN_STEPS = 4                         # target grid length for pipelining / megacore

_CHIP_BUDGET_CACHE = None


# --------------------------------------------------------------------------
# Kernels
# --------------------------------------------------------------------------
def _tiled_copy_kernel(x_ref, o_ref):
    # Identity copy of the current tile. A view/reshape has no arithmetic:
    # move bytes; the shape reinterpretation is metadata outside the kernel.
    o_ref[...] = x_ref[...]


def _dma_copy_kernel(x_hbm_ref, o_hbm_ref, sem):
    # One whole-buffer HBM->HBM DMA; no VMEM staging, no vld/vst work.
    cp = pltpu.make_async_copy(x_hbm_ref, o_hbm_ref, sem)
    cp.start()
    cp.wait()


# --------------------------------------------------------------------------
# Tiling / chip helpers
# --------------------------------------------------------------------------
def _min_sublanes(dtype):
    """Minimum second-to-last block dim for full, packed vreg tiles."""
    itemsize = jnp.dtype(dtype).itemsize
    if itemsize >= 4:
        return 8
    if itemsize == 2:
        return 16
    return 32  # int8 / fp8


def _chip_block_budget():
    """(block_bytes, vmem_limit_bytes_or_None), generation aware.

    Pipelined footprint is ~4x block (double-buffered in + out), which we keep
    within each generation's scoped-VMEM headroom:
      v5e : 2 MiB block  (8 MiB pipelined, 16 MiB scoped default)
      v6e : 4 MiB block  (16 MiB pipelined, 32 MiB scoped default)
      v7x : 8 MiB block  (32 MiB pipelined), raise vmem_limit to 48 MiB of the
            64 MiB physical VMEM.
    Unknown chips fall back to the conservative v5e budget.
    """
    global _CHIP_BUDGET_CACHE
    if _CHIP_BUDGET_CACHE is not None:
        return _CHIP_BUDGET_CACHE
    kind = ""
    try:
        kind = jax.devices()[0].device_kind.lower()
    except Exception:
        pass
    if "v7" in kind or "7x" in kind:
        _CHIP_BUDGET_CACHE = (8 << 20, 48 << 20)
    elif "v6" in kind:
        _CHIP_BUDGET_CACHE = (4 << 20, None)
    else:
        _CHIP_BUDGET_CACHE = (2 << 20, None)
    return _CHIP_BUDGET_CACHE


def _round_down(a, m):
    return (a // m) * m


def _choose_tiling(total, dtype, block_bytes):
    """Pick (rows, lane, blk_rows) for a lane-dense tiled copy.

    Returns None when the flat element count is not a multiple of 128; the
    caller then uses the shape-agnostic whole-buffer DMA copy instead (no
    padding pass).  Tail blocks are handled by pl.cdiv + Pallas masking, so no
    divisibility of rows by blk_rows is required.
    """
    if total % _LANE != 0:
        return None
    itemsize = jnp.dtype(dtype).itemsize
    min_rows = _min_sublanes(dtype)

    # Widest lane dim that divides total while keeping >= min_rows rows
    # (wide, unmasked stores; fewer, fatter DMAs).
    lane = _LANE
    for cand in (2048, 1024, 512, 256):
        if total % cand == 0 and (total // cand) >= min_rows:
            lane = cand
            break
    rows = total // lane

    total_bytes = total * itemsize
    if rows <= min_rows or total_bytes <= _SINGLE_BLOCK_MAX_BYTES:
        # Tiny buffer: one block spanning the full extent.  block_shape equal
        # to the array dims is always layout-legal, even if rows % 8 != 0.
        return rows, lane, rows

    # Largest block under the per-chip VMEM budget, multiple of min_rows.
    cap_rows = max(min_rows, _round_down(block_bytes // (lane * itemsize), min_rows))
    blk_rows = min(cap_rows, max(min_rows, _round_down(rows, min_rows)))
    # Guarantee >= _MIN_STEPS grid iterations so input/compute/output DMAs
    # pipeline and, on v7x, both TensorCores are used.
    steps_cap = max(min_rows, _round_down(rows // _MIN_STEPS, min_rows))
    blk_rows = min(blk_rows, steps_cap)
    return rows, lane, blk_rows


def _resolve_shape(total, shape):
    """Resolve a single -1 like torch.view and check the element count."""
    shape = tuple(int(s) for s in shape)
    if -1 in shape:
        known = 1
        for s in shape:
            if s != -1:
                known *= s
        assert known > 0 and total % known == 0, (
            f"view shape {shape} incompatible with {total} elements")
        shape = tuple(total // known if s == -1 else s for s in shape)
    prod = 1
    for s in shape:
        prod *= s
    assert prod == total, f"view shape {shape} incompatible with {total} elements"
    return shape


# --------------------------------------------------------------------------
# Copy implementations
# --------------------------------------------------------------------------
def _dma_copy(x):
    """Materializing copy via one whole-buffer HBM->HBM DMA."""
    flat = jnp.reshape(x, (-1,))  # metadata-only; contiguous 1-D buffer
    nbytes = flat.size * jnp.dtype(flat.dtype).itemsize
    return pl.pallas_call(
        _dma_copy_kernel,
        out_shape=jax.ShapeDtypeStruct(flat.shape, flat.dtype),
        in_specs=[pl.BlockSpec(memory_space=pl.ANY)],
        out_specs=pl.BlockSpec(memory_space=pl.ANY),
        scratch_shapes=[pltpu.SemaphoreType.DMA(())],
        compiler_params=pltpu.CompilerParams(has_side_effects=True),
        cost_estimate=pl.CostEstimate(
            flops=0, transcendentals=0, bytes_accessed=2 * nbytes),
    )(flat)


def _tiled_copy(x):
    """Materializing copy via a lane-dense, pipelined streaming kernel."""
    total = x.size
    block_bytes, vmem_limit = _chip_block_budget()
    tiling = _choose_tiling(total, x.dtype, block_bytes)
    if tiling is None:
        # Element count not a multiple of 128: shape-agnostic DMA copy (no
        # pad + slice HBM passes).
        return _dma_copy(x)

    rows, lane, blk_rows = tiling
    buf2d = jnp.reshape(x, (rows, lane))  # metadata reshape, contiguous input
    itemsize = jnp.dtype(x.dtype).itemsize
    grid = (pl.cdiv(rows, blk_rows),)     # tail block masked by Pallas

    out2d = pl.pallas_call(
        _tiled_copy_kernel,
        out_shape=jax.ShapeDtypeStruct((rows, lane), x.dtype),
        grid=grid,
        in_specs=[pl.BlockSpec((blk_rows, lane), lambda i: (i, 0))],
        out_specs=pl.BlockSpec((blk_rows, lane), lambda i: (i, 0)),
        compiler_params=pltpu.CompilerParams(
            dimension_semantics=("parallel",),
            vmem_limit_bytes=vmem_limit,
        ),
        cost_estimate=pl.CostEstimate(
            flops=0, transcendentals=0, bytes_accessed=2 * total * itemsize),
    )(buf2d)
    return out2d


# --------------------------------------------------------------------------
# Public API
# --------------------------------------------------------------------------
def pallas_view(x, shape, *, force_copy=False, copy_impl="tiled"):
    """torch.Tensor.view(shape) semantics (row-major reshape).

    Default is the metadata-only path (zero HBM traffic), matching torch's
    view of a contiguous buffer exactly.  Set force_copy=True to materialize
    a fresh buffer through a Pallas kernel: copy_impl="tiled" uses the
    pipelined streaming copy, copy_impl="dma" uses a single whole-buffer
    HBM->HBM DMA.
    """
    total = x.size
    shape = _resolve_shape(total, shape)

    if not force_copy:
        # Metadata-only reshape: exactly torch.view on contiguous storage.
        return jnp.reshape(x, shape)

    if copy_impl == "dma":
        out_flat = _dma_copy(x)
    else:
        out_flat = _tiled_copy(x)
    return jnp.reshape(out_flat, shape)


class View:
    """JAX/Pallas equivalent of the stutz2020 View module."""

    def __init__(self, *args):
        self.shape = args

    def __call__(self, x):
        return pallas_view(x, self.shape)


# --------------------------------------------------------------------------
# Self-test
# --------------------------------------------------------------------------
if __name__ == "__main__":
    key = jax.random.PRNGKey(0)
    k1, k2 = jax.random.split(key)

    # 1) Canonical use (default metadata-only path): flatten conv features.
    x = jax.random.normal(key, (2, 4, 16, 16), dtype=jnp.float32)
    view = View(-1, 4 * 16 * 16)
    out = jax.block_until_ready(view(x))
    ref = x.reshape(2, 4 * 16 * 16)
    assert out.shape == ref.shape and out.dtype == ref.dtype
    assert bool(jnp.all(out == ref))

    # 2) Opt-in tiled streaming copy, large enough (512 KiB) to exercise the
    #    multi-step (pipelined, megacore-shardable) tiling with a masked tail.
    xl = jax.random.normal(k1, (4, 8, 64, 64), dtype=jnp.float32)
    outl = jax.block_until_ready(pallas_view(xl, (4, -1), force_copy=True))
    refl = xl.reshape(4, 8 * 64 * 64)
    assert outl.shape == refl.shape and bool(jnp.all(outl == refl))

    # 3) bf16 exercises the dtype-aware sublane minimum on the tiled path.
    xb = jax.random.normal(k2, (2, 8, 16, 16)).astype(jnp.bfloat16)
    outb = jax.block_until_ready(pallas_view(xb, (-1, 8 * 16 * 16), force_copy=True))
    refb = xb.reshape(2, 8 * 16 * 16)
    assert outb.shape == refb.shape and bool(jnp.all(outb == refb))

    # 4) Whole-buffer HBM->HBM DMA copy path.
    outd = jax.block_until_ready(
        pallas_view(x, (2, -1), force_copy=True, copy_impl="dma"))
    assert outd.shape == ref.shape and bool(jnp.all(outd == ref))

    # 5) Element count not a multiple of 128: forced copy falls back to the
    #    shape-agnostic DMA copy (no padding pass).
    xo = jax.random.normal(key, (2, 3, 5, 7), dtype=jnp.float32)
    outo = jax.block_until_ready(pallas_view(xo, (6, 35), force_copy=True))
    assert outo.shape == (6, 35) and bool(jnp.all(outo == xo.reshape(6, 35)))

    print("KERNEL_OK")
</pallas_src>

<mosaic_0001>
module attributes {stable_mosaic.version = 11 : i64} {
  func.func @_tiled_copy_kernel(%arg0: i32, %arg1: memref<16x2048xf32, #tpu.memory_space<vmem>>, %arg2: memref<16x2048xf32, #tpu.memory_space<vmem>>) attributes {dimension_semantics = [#tpu.dimension_semantics<parallel>], iteration_bounds = array<i64: 4>, scalar_prefetch = 0 : i64, scratch_operands = 0 : i64, tpu.core_type = #tpu.core_type<tc>, window_params = [{transform_indices = @transform_0, window_bounds = array<i64: 16, 2048>}, {transform_indices = @transform_1, window_bounds = array<i64: 16, 2048>}]} {
    %c0 = arith.constant 0 : index
    %c0_0 = arith.constant 0 : index
    %0 = vector.load %arg1[%c0, %c0_0] : memref<16x2048xf32, #tpu.memory_space<vmem>>, vector<16x2048xf32>
    %c0_1 = arith.constant 0 : index
    %c0_2 = arith.constant 0 : index
    %1 = vector.load %arg2[%c0_1, %c0_2] : memref<16x2048xf32, #tpu.memory_space<vmem>>, vector<16x2048xf32>
    tpu.vector_store %arg2[%c0_1, %c0_2], %0 {strides = array<i32>} : memref<16x2048xf32, #tpu.memory_space<vmem>>, vector<16x2048xf32>,
    return
  }
  func.func @transform_0(%arg0: i32) -> (i32, i32) {
    %c0_i32 = arith.constant 0 : i32
    %c0_i32_0 = arith.constant 0 : i32
    return %arg0, %c0_i32 : i32, i32
  }
  func.func @transform_1(%arg0: i32) -> (i32, i32) {
    %c0_i32 = arith.constant 0 : i32
    %c0_i32_0 = arith.constant 0 : i32
    return %arg0, %c0_i32 : i32, i32
  }
}

</mosaic_0001>

<llo_original>
// kernel: tpu_custom_call.1
$region0: #{tpu_custom_call.1}
  #allocation0 [shape = 'u32[]', space=smem, size = 0x4, offset = 0x4, fixed_abs, tag = 'smem constant byte address 0x4 - core index']
  #allocation1 [shape = 'u32[72,128]{1,0:T(1,128)}', space=vmem, size = 0x9000, scoped, tag = 'internal scratch']
  %s0 = inlined_call_operand.hbm [shape: f32[64,2048], index: 0, kind: input, shape index: {}]
  %s1 = inlined_call_operand.hbm [shape: f32[64,2048], index: 1, kind: output, shape index: {}]
  %s2 = sld [smem:[#allocation0]]
  $region41: #{tpu_custom_call.1} parent=0
    _
  %s4 = ssub.s32 1, %s2
  %s5 = scalar_select 0, %s4, %s2
  $region1: #{tpu_custom_call.1} parent=0
    #allocation2 [shape = 'u8[262144]{0}', space=vmem, size = 0x40000, scoped, tag = 'input window, operand 0']
    #allocation3 [shape = 's32[2]{0}', space=sflag, size = 0x8, scoped, tag = 'scoped memory for tpu_custom_call.1']
    #allocation4 [shape = 's32[2]{0}', space=sflag, size = 0x8, scoped, tag = 'scoped memory for tpu_custom_call.1']
    #allocation5 [shape = 'u8[262144]{0}', space=vmem, size = 0x40000, scoped, tag = 'output window, operand 0']
    %6 = vsyncpa [#allocation3], 0
    %s7 = scalar_lea.sflag [#allocation3], 1
    %8 = vsyncpa %s7, 0
    %9 = vsyncpa [#allocation4], 0
    %s10 = scalar_lea.sflag [#allocation4], 1
    %11 = vsyncpa %s10, 0
    loop: start=0, step=1, limit=6
    $region2: #{tpu_custom_call.1} parent=1 // loop_pre_header
      _
    $region3: #{tpu_custom_call.1} parent=1 // loop_header
      %s13 = sphi 0, %s17
      %p14 = scmp.ge.s32.totalorder %s13, 6
      %s23 = sphi 0, %s25
      %s26 = sphi 0, %s23
      %s27 = sphi 0, %s26
      %s43 = sphi 0, %s27
      %s49 = sphi 0, %s51
      %s52 = sphi 0, %s49
      %s53 = sphi 0, %s52
      %s69 = sphi 0, %s53
    $region4: #{tpu_custom_call.1} parent=1 // loop_header_branch
      %16 = sbr.rel (%p14) target = $region8
    $region5: #{tpu_custom_call.1} parent=1 // loop_body
      %s18 = ssub.s32 %s13, 1
      %s19 = ssub.s32 %s13, 2
      %s20 = sadd.s32 %s13, 1
      %s21 = ssub.s32 %s13, %s20
      %p22 = scmp.eq.s32.totalorder %s21, 0
      %s24 = sadd.s32 %s23, 1
      %s25 = scalar_select %p22, %s23, %s24
      %p28 = pneg %p22
      %p29 = scmp.eq.s32.totalorder %s13, 3
      %p30 = por %p28, %p29
      %p31 = scmp.ne.s32.totalorder %s23, %s26
      %p32 = scmp.eq.s32.totalorder %s13, 0
      %p33 = por %p31, %p32
      %p34 = scmp.ne.s32.totalorder %s23, %s26
      %p35 = scmp.eq.s32.totalorder %s18, 3
      %p36 = por %p34, %p35
      %p37 = scmp.ne.s32.totalorder %s26, %s27
      %p38 = scmp.eq.s32.totalorder %s18, 0
      %p39 = por %p37, %p38
      %p40 = scmp.ne.s32.totalorder %s26, %s27
      %p41 = scmp.eq.s32.totalorder %s19, 3
      %p42 = por %p40, %p41
      %p44 = scmp.ne.s32.totalorder %s27, %s43
      %p45 = scmp.eq.s32.totalorder %s19, 0
      %p46 = por %p44, %p45
      %s47 = ssub.s32 %s13, %s20
      %p48 = scmp.eq.s32.totalorder %s47, 0
      %s50 = sadd.s32 %s49, 1
      %s51 = scalar_select %p48, %s49, %s50
      %p54 = pneg %p48
      %p55 = scmp.eq.s32.totalorder %s13, 3
      %p56 = por %p54, %p55
      %p57 = scmp.ne.s32.totalorder %s49, %s52
      %p58 = scmp.eq.s32.totalorder %s13, 0
      %p59 = por %p57, %p58
      %p60 = scmp.ne.s32.totalorder %s49, %s52
      %p61 = scmp.eq.s32.totalorder %s18, 3
      %p62 = por %p60, %p61
      %p63 = scmp.ne.s32.totalorder %s52, %s53
      %p64 = scmp.eq.s32.totalorder %s18, 0
      %p65 = por %p63, %p64
      %p66 = scmp.ne.s32.totalorder %s52, %s53
      %p67 = scmp.eq.s32.totalorder %s19, 3
      %p68 = por %p66, %p67
      %p70 = scmp.ne.s32.totalorder %s53, %s69
      %p71 = scmp.eq.s32.totalorder %s19, 0
      %p72 = por %p70, %p71
      %p73 = scmp.le.s32.totalorder 1, %s13
      %p74 = scmp.lt.s32.totalorder %s13, 5
      %p75 = pnand %p73, %p74
      %p76 = pneg %p75
      // Predicated region
      $region9: #{tpu_custom_call.1} parent=5 // pred_check
        _
      $region10: #{tpu_custom_call.1} parent=5 // pred_check_branch
        %78 = sbr.rel (%p75) target = $region12
      $region11: #{tpu_custom_call.1} parent=5 // pred_region
        %s79 = ssub.s32 %s13, 1
      $region12: #{tpu_custom_call.1} parent=5 // pred_fallthru
        _
      %p80 = scmp.lt.s32.totalorder %s13, 4
      // Predicated region
      $region13: #{tpu_custom_call.1} parent=5 // pred_check
        %p81 = pneg %p80
      $region14: #{tpu_custom_call.1} parent=5 // pred_check_branch
        %83 = sbr.rel (%p81) target = $region16
      $region15: #{tpu_custom_call.1} parent=5 // pred_region
        // Predicated region
        $region17: #{tpu_custom_call.1} parent=15 // pred_check
          %p84 = pneg %p33
        $region18: #{tpu_custom_call.1} parent=15 // pred_check_branch
          %86 = sbr.rel (%p84) target = $region20
        $region19: #{tpu_custom_call.1} parent=15 // pred_region
          %s87 = sand.u32 %s23, 1
          %s88 = scalar_lea.sflag [#allocation3], %s87
          %s89 = sand.u32 %s23, 1
          %s90 = smul.addr %s89, 256
          %s91 = scalar_lea.vmem [#allocation2], %s90
          %s92 = smul.u32 2, %s13
          %94 = vsyncadd %s88, 0
          %s95 = smul.addr %s92, 16
          %s96 = smul.addr %s95, 8
          %s97 = scalar_lea.hbm %s0, %s96
          %s98 = sshll.u32 %s97, 4
          %s99 = int_to_ptr.hbm [resolvable:$true] %s98
          %s100 = sshll.u32 %s91, 4
          %s101 = int_to_ptr.vmem [resolvable:$true] %s100
          %106 = dma.hbm_to_vmem [thread:$0]  %s99, 4096, %s101, %s88, 2048, 2048, 128
        $region20: #{tpu_custom_call.1} parent=15 // pred_fallthru
          _
      $region16: #{tpu_custom_call.1} parent=5 // pred_fallthru
        _
      %p107 = scmp.le.s32.totalorder 1, %s13
      %p108 = scmp.lt.s32.totalorder %s13, 5
      %p109 = pnand %p107, %p108
      %p110 = pneg %p109
      // Predicated region
      $region21: #{tpu_custom_call.1} parent=5 // pred_check
        _
      $region22: #{tpu_custom_call.1} parent=5 // pred_check_branch
        %112 = sbr.rel (%p109) target = $region24
      $region23: #{tpu_custom_call.1} parent=5 // pred_region
        %s113 = ssub.s32 %s13, 1
        %s114 = sand.u32 %s26, 1
        %s115 = scalar_lea.sflag [#allocation3], %s114
        %s116 = sand.u32 %s26, 1
        %s117 = smul.addr %s116, 256
        %s118 = scalar_lea.vmem [#allocation2], %s117
        // Predicated region
        $region25: #{tpu_custom_call.1} parent=23 // pred_check
          %p119 = pneg %p39
        $region26: #{tpu_custom_call.1} parent=23 // pred_check_branch
          %121 = sbr.rel (%p119) target = $region28
        $region27: #{tpu_custom_call.1} parent=23 // pred_region
          %123 = dma.done %s115, 4096
        $region28: #{tpu_custom_call.1} parent=23 // pred_fallthru
          _
        %s124 = sand.u32 %s26, 1
        %s125 = scalar_lea.sflag [#allocation3], %s124
        %s126 = sand.u32 %s26, 1
        %s127 = smul.addr %s126, 256
        %s128 = scalar_lea.vmem [#allocation2], %s127
        %p129 = pneg %p39
        %p130 = pneg %p36
        %p131 = pneg %p65
        %p132 = pneg %p62
        %s133 = sand.u32 %s52, 1
        %s134 = scalar_lea.sflag [#allocation4], %s133
        %s135 = sand.u32 %s52, 1
        %s136 = smul.addr %s135, 256
        %s137 = scalar_lea.vmem [#allocation5], %s136
        %s138 = smul.u32 2, %s18
        %s139 = smul.u32 2, %s18
        %v140 = vld [vmem:[%s118] sm:$0xff]
        %v141 = vld [vmem:[%s118 + $0x8] sm:$0xff]
        %v142 = vld [vmem:[%s118 + $0x10] sm:$0xff]
        %v143 = vld [vmem:[%s118 + $0x18] sm:$0xff]
        %v144 = vld [vmem:[%s118 + $0x20] sm:$0xff]
        %v145 = vld [vmem:[%s118 + $0x28] sm:$0xff]
        %v146 = vld [vmem:[%s118 + $0x30] sm:$0xff]
        %v147 = vld [vmem:[%s118 + $0x38] sm:$0xff]
        %v148 = vld [vmem:[%s118 + $0x40] sm:$0xff]
        %v149 = vld [vmem:[%s118 + $0x48] sm:$0xff]
        %v150 = vld [vmem:[%s118 + $0x50] sm:$0xff]
        %v151 = vld [vmem:[%s118 + $0x58] sm:$0xff]
        %v152 = vld [vmem:[%s118 + $0x60] sm:$0xff]
        %v153 = vld [vmem:[%s118 + $0x68] sm:$0xff]
        %v154 = vld [vmem:[%s118 + $0x70] sm:$0xff]
        %v155 = vld [vmem:[%s118 + $0x78] sm:$0xff]
        %v156 = vld [vmem:[%s118 + $0x80] sm:$0xff]
        %v157 = vld [vmem:[%s118 + $0x88] sm:$0xff]
        %v158 = vld [vmem:[%s118 + $0x90] sm:$0xff]
        %v159 = vld [vmem:[%s118 + $0x98] sm:$0xff]
        %v160 = vld [vmem:[%s118 + $0xa0] sm:$0xff]
        %v161 = vld [vmem:[%s118 + $0xa8] sm:$0xff]
        %v162 = vld [vmem:[%s118 + $0xb0] sm:$0xff]
        %v163 = vld [vmem:[%s118 + $0xb8] sm:$0xff]
        %v164 = vld [vmem:[%s118 + $0xc0] sm:$0xff]
        %v165 = vld [vmem:[%s118 + $0xc8] sm:$0xff]
        %v166 = vld [vmem:[%s118 + $0xd0] sm:$0xff]
        %v167 = vld [vmem:[%s118 + $0xd8] sm:$0xff]
        %v168 = vld [vmem:[%s118 + $0xe0] sm:$0xff]
        %v169 = vld [vmem:[%s118 + $0xe8] sm:$0xff]
        %v170 = vld [vmem:[%s118 + $0xf0] sm:$0xff]
        %v171 = vld [vmem:[%s118 + $0xf8] sm:$0xff]
        %172 = vst [vmem:[%s137] sm:$0xff] %v140
        %173 = vst [vmem:[%s137 + $0x8] sm:$0xff] %v141
        %174 = vst [vmem:[%s137 + $0x10] sm:$0xff] %v142
        %175 = vst [vmem:[%s137 + $0x18] sm:$0xff] %v143
        %176 = vst [vmem:[%s137 + $0x20] sm:$0xff] %v144
        %177 = vst [vmem:[%s137 + $0x28] sm:$0xff] %v145
        %178 = vst [vmem:[%s137 + $0x30] sm:$0xff] %v146
        %179 = vst [vmem:[%s137 + $0x38] sm:$0xff] %v147
        %180 = vst [vmem:[%s137 + $0x40] sm:$0xff] %v148
        %181 = vst [vmem:[%s137 + $0x48] sm:$0xff] %v149
        %182 = vst [vmem:[%s137 + $0x50] sm:$0xff] %v150
        %183 = vst [vmem:[%s137 + $0x58] sm:$0xff] %v151
        %184 = vst [vmem:[%s137 + $0x60] sm:$0xff] %v152
        %185 = vst [vmem:[%s137 + $0x68] sm:$0xff] %v153
        %186 = vst [vmem:[%s137 + $0x70] sm:$0xff] %v154
        %187 = vst [vmem:[%s137 + $0x78] sm:$0xff] %v155
        %188 = vst [vmem:[%s137 + $0x80] sm:$0xff] %v156
        %189 = vst [vmem:[%s137 + $0x88] sm:$0xff] %v157
        %190 = vst [vmem:[%s137 + $0x90] sm:$0xff] %v158
        %191 = vst [vmem:[%s137 + $0x98] sm:$0xff] %v159
        %192 = vst [vmem:[%s137 + $0xa0] sm:$0xff] %v160
        %193 = vst [vmem:[%s137 + $0xa8] sm:$0xff] %v161
        %194 = vst [vmem:[%s137 + $0xb0] sm:$0xff] %v162
        %195 = vst [vmem:[%s137 + $0xb8] sm:$0xff] %v163
        %196 = vst [vmem:[%s137 + $0xc0] sm:$0xff] %v164
        %197 = vst [vmem:[%s137 + $0xc8] sm:$0xff] %v165
        %198 = vst [vmem:[%s137 + $0xd0] sm:$0xff] %v166
        %199 = vst [vmem:[%s137 + $0xd8] sm:$0xff] %v167
        %200 = vst [vmem:[%s137 + $0xe0] sm:$0xff] %v168
        %201 = vst [vmem:[%s137 + $0xe8] sm:$0xff] %v169
        %202 = vst [vmem:[%s137 + $0xf0] sm:$0xff] %v170
        %203 = vst [vmem:[%s137 + $0xf8] sm:$0xff] %v171
        %s204 = sand.u32 %s52, 1
        %s205 = scalar_lea.sflag [#allocation4], %s204
        %s206 = sand.u32 %s52, 1
        %s207 = smul.addr %s206, 256
        %s208 = scalar_lea.vmem [#allocation5], %s207
        // Predicated region
        $region29: #{tpu_custom_call.1} parent=23 // pred_check
          %p209 = pneg %p62
        $region30: #{tpu_custom_call.1} parent=23 // pred_check_branch
          %211 = sbr.rel (%p209) target = $region32
        $region31: #{tpu_custom_call.1} parent=23 // pred_region
          %s212 = smul.u32 2, %s18
          %214 = vsyncadd %s205, 0
          %s215 = smul.addr %s212, 16
          %s216 = smul.addr %s215, 8
          %s217 = scalar_lea.hbm %s1, %s216
          %s218 = sshll.u32 %s208, 4
          %s219 = int_to_ptr.vmem [resolvable:$true] %s218
          %s220 = sshll.u32 %s217, 4
          %s221 = int_to_ptr.hbm [resolvable:$true] %s220
          %226 = dma.vmem_to_hbm [thread:$0]  %s219, 4096, %s221, %s205, 2048, 2048, 128
        $region32: #{tpu_custom_call.1} parent=23 // pred_fallthru
          _
      $region24: #{tpu_custom_call.1} parent=5 // pred_fallthru
        _
      %p227 = scmp.le.s32.totalorder 2, %s13
      // Predicated region
      $region33: #{tpu_custom_call.1} parent=5 // pred_check
        %p228 = pneg %p227
      $region34: #{tpu_custom_call.1} parent=5 // pred_check_branch
        %230 = sbr.rel (%p228) target = $region36
      $region35: #{tpu_custom_call.1} parent=5 // pred_region
        %s231 = ssub.s32 %s13, 2
        // Predicated region
        $region37: #{tpu_custom_call.1} parent=35 // pred_check
          %p232 = pneg %p68
        $region38: #{tpu_custom_call.1} parent=35 // pred_check_branch
          %234 = sbr.rel (%p232) target = $region40
        $region39: #{tpu_custom_call.1} parent=35 // pred_region
          %s235 = sand.u32 %s53, 1
          %s236 = scalar_lea.sflag [#allocation4], %s235
          %s237 = sand.u32 %s53, 1
          %s238 = smul.addr %s237, 256
          %s239 = scalar_lea.vmem [#allocation5], %s238
          %241 = dma.done %s236, 4096
        $region40: #{tpu_custom_call.1} parent=35 // pred_fallthru
          _
      $region36: #{tpu_custom_call.1} parent=5 // pred_fallthru
        _
    $region6: #{tpu_custom_call.1} parent=1 // loop_footer
      %s17 = sadd.s32 1, %s13
    $region7: #{tpu_custom_call.1} parent=1 // loop_footer_branch
      %12 = sbr.rel target = $region3
    $region8: #{tpu_custom_call.1} parent=1 // loop_exit
      _
    %242 = vsyncpa [#allocation3], 1
    %s243 = scalar_lea.sflag [#allocation3], 1
    %244 = vsyncpa %s243, 1
    %245 = vsyncpa [#allocation4], 1
    %s246 = scalar_lea.sflag [#allocation4], 1
    %247 = vsyncpa %s246, 1

</llo_original>
